<compile_context>
chip_gen: v7x
topology: tpu7x:2x2x1
jax: 0.10.0
libtpu: 0.0.40
codegen_flags: <defaults>
</compile_context>

<pallas_src>
import functools

import jax
import jax.numpy as jnp
from jax.experimental import pallas as pl
from jax.experimental.pallas import tpu as pltpu

_LANES = 128
_SUBLANES = 8


def _default_tiling():
    """Per-generation (tile_rows, num_splits) defaults."""
    kind = ""
    try:
        kind = jax.devices()[0].device_kind.lower()
    except Exception:
        pass
    if "v7" in kind:
        return 4096, 2      # 2 TensorCores -> parallel split; big tiles for 3.2 TB/s
    if "v6" in kind:
        return 2048, 1      # ~1 MiB/input/step ≈ 85% of HBM roofline, single TC
    if "v5" in kind:
        return 1024, 1      # v5e: per-step DMA already dominates the fixed overhead
    return 2048, 1


def _wce_kernel(eps, one_plus_eps, n_valid, needs_mask, x_ref, t_ref, out_ref):
    # x_ref / t_ref : (tile_rows, 128) tile of probabilities / targets (native dtype).
    # out_ref       : (1, 3, 8, 128) per-split accumulator, resident across the
    #                 inner ("arbitrary") grid axis.
    @pl.when(pl.program_id(1) == 0)
    def _():
        out_ref[...] = jnp.zeros_like(out_ref)

    x = x_ref[...].astype(jnp.float32)
    t = t_ref[...].astype(jnp.float32)
    tr = x.shape[0]

    if needs_mask:
        # Global element index of every slot in this tile.  Slots >= n_valid are
        # either the tiny vreg-alignment zero pad or OOB/stale data from a
        # partial tail block.  Substitute safe values BEFORE the logs (garbage
        # could be Inf/NaN and 0*NaN = NaN), then select-zero the one term
        # whose masked value is not already exactly zero.
        blk = pl.program_id(0) * pl.num_programs(1) + pl.program_id(1)
        row = blk * tr + jax.lax.broadcasted_iota(jnp.int32, (tr, _LANES), 0)
        gidx = row * _LANES + jax.lax.broadcasted_iota(jnp.int32, (tr, _LANES), 1)
        valid = gidx < n_valid
        x = jnp.where(valid, x, 0.0)
        t = jnp.where(valid, t, 0.0)

    log_x = jnp.log(x + eps)              # log(input + eps)
    log_1mx = jnp.log(one_plus_eps - x)   # log(1 - input + eps), eps folded at trace time
    s2_term = (1.0 - t) * log_1mx
    if needs_mask:
        s2_term = jnp.where(valid, s2_term, 0.0)

    def fold(v):
        # (tile_rows, 128) -> (8, 128): layout-preserving reshape + VPU adds;
        # no cross-lane (XLU) reduction per tile.
        return jnp.sum(v.reshape(tr // _SUBLANES, _SUBLANES, _LANES), axis=0)

    out_ref[0, 0, :, :] += fold(x)            # S_p
    out_ref[0, 1, :, :] += fold(t * log_x)    # S_1
    out_ref[0, 2, :, :] += fold(s2_term)      # S_2


def weighted_cross_entropy_loss(inputs, targets, *, weight=True, eps=1e-5,
                                tile_rows=None, num_splits=None):
    """Pallas implementation of WeightedCrossEntropyLoss(weight).forward."""
    assert inputs.shape == targets.shape
    n = int(inputs.size)   # element count of the squeezed tensor (squeeze(1) keeps it)

    if tile_rows is None or num_splits is None:
        d_tr, d_ns = _default_tiling()
        tile_rows = d_tr if tile_rows is None else tile_rows
        num_splits = d_ns if num_splits is None else num_splits

    rows = -(-n // _LANES)                         # ceil(n / 128)
    rows8 = -(-rows // _SUBLANES) * _SUBLANES      # round up to a sublane multiple

    # Lane-dense (rows8, 128) view.  When n is a multiple of 1024 this is a free
    # reshape (no HBM copy).  Otherwise pad only to the next (8,128) vreg
    # boundary (< 1024 extra elements); padded slots and any partial tail block
    # are masked inside the kernel, so no full-tile padding is ever needed.
    def prep(a):
        flat = jnp.reshape(a, (-1,))
        if n != rows8 * _LANES:
            flat = jnp.pad(flat, (0, rows8 * _LANES - n))
        return jnp.reshape(flat, (rows8, _LANES))

    x2d, t2d = prep(inputs), prep(targets)

    # Tile / grid geometry: tile_rows rounded to a sublane multiple and clamped
    # to the array so block_shape never exceeds the array extent.
    tr = max(_SUBLANES, (min(int(tile_rows), rows8) // _SUBLANES) * _SUBLANES)
    blocks = -(-rows8 // tr)
    ns = max(1, min(int(num_splits), blocks))
    inner = -(-blocks // ns)
    covered = ns * inner * tr * _LANES             # elements the grid will touch
    needs_mask = covered != n
    last_block = blocks - 1

    def in_index_map(s, i):
        # Clamp fully out-of-range block indices (possible when blocks % ns != 0);
        # their contributions are masked to exactly zero in the kernel anyway.
        return (jnp.minimum(s * inner + i, last_block), 0)

    in_spec = pl.BlockSpec((tr, _LANES), in_index_map)
    out_spec = pl.BlockSpec((1, 3, _SUBLANES, _LANES), lambda s, i: (s, 0, 0, 0))

    itemsize = jnp.dtype(inputs.dtype).itemsize + jnp.dtype(targets.dtype).itemsize
    cost = pl.CostEstimate(
        flops=9 * n,
        transcendentals=2 * n,
        bytes_accessed=n * itemsize + ns * 3 * _SUBLANES * _LANES * 4)

    sums = pl.pallas_call(
        functools.partial(_wce_kernel, float(eps), float(1.0 + eps), n, needs_mask),
        out_shape=jax.ShapeDtypeStruct((ns, 3, _SUBLANES, _LANES), jnp.float32),
        grid_spec=pltpu.PrefetchScalarGridSpec(
            num_scalar_prefetch=0,
            grid=(ns, inner),
            in_specs=[in_spec, in_spec],
            out_specs=out_spec,
        ),
        compiler_params=pltpu.CompilerParams(
            dimension_semantics=("parallel", "arbitrary"),
            vmem_limit_bytes=32 * 1024 * 1024),
        cost_estimate=cost,
    )(x2d, t2d)

    totals = jnp.sum(sums, axis=(0, 2, 3))         # (3,) = [S_p, S_1, S_2]
    sum_p, s1, s2 = totals[0], totals[1], totals[2]
    n_f = jnp.float32(n)
    w = (n_f - sum_p) / sum_p if weight else jnp.float32(1.0)
    return -(w * s1 + s2) / n_f


def weighted_cross_entropy_loss_ref(inputs, targets, weight=True, eps=1e-5):
    """Pure-JAX reference matching the PyTorch module semantics."""
    x = inputs.astype(jnp.float32)
    z = targets.astype(jnp.float32)
    n = x.size
    sum_p = jnp.sum(x)
    w = (n - sum_p) / sum_p if weight else 1.0
    crossent = -1.0 * jnp.sum(w * z * jnp.log(x + eps) +
                              (1.0 - z) * jnp.log(1.0 - x + eps))
    return crossent / n


if __name__ == "__main__":
    key = jax.random.PRNGKey(0)
    keys = jax.random.split(key, 6)

    def make(kp, kl, shape):
        probs = jax.random.uniform(kp, shape, jnp.float32, minval=0.01, maxval=0.99)
        labels = (jax.random.uniform(kl, shape) > 0.5).astype(jnp.float32)
        return probs, labels

    # Case 1: [B,C,H,W]=(2,4,16,16); squeeze(dim=1) is a no-op for C=4, N=B*C*H*W.
    #         N % 1024 == 0 -> zero-copy fast path, no masking, default tiling.
    c1 = make(keys[0], keys[1], (2, 4, 16, 16)) + ({},)
    # Case 2: non-vreg-aligned element count -> small alignment pad + in-kernel mask.
    c2 = make(keys[2], keys[3], (2, 4, 9, 11)) + ({},)
    # Case 3: zero-copy path with a partial tail block + a parallel split whose
    #         trailing block is fully out of range (exercises the index clamp).
    c3 = make(keys[4], keys[5], (2, 4, 16, 40)) + (dict(tile_rows=16, num_splits=2),)

    for probs, labels, kwargs in (c1, c2, c3):
        for weight in (True, False):
            got = jax.block_until_ready(
                weighted_cross_entropy_loss(probs, labels, weight=weight, **kwargs))
            want = weighted_cross_entropy_loss_ref(probs, labels, weight=weight)
            assert abs(float(got) - float(want)) < 2e-4 + 2e-4 * abs(float(want)), (
                probs.shape, weight, float(got), float(want))

    print("KERNEL_OK")
</pallas_src>

<mosaic_0001>
module attributes {stable_mosaic.version = 11 : i64} {
  func.func @_wce_kernel(%arg0: i32, %arg1: i32, %arg2: memref<16x128xf32, #tpu.memory_space<vmem>>, %arg3: memref<16x128xf32, #tpu.memory_space<vmem>>, %arg4: memref<1x3x8x128xf32, #tpu.memory_space<vmem>>) attributes {dimension_semantics = [#tpu.dimension_semantics<parallel>, #tpu.dimension_semantics<arbitrary>], iteration_bounds = array<i64: 1, 1>, scalar_prefetch = 0 : i64, scratch_operands = 0 : i64, tpu.core_type = #tpu.core_type<tc>, window_params = [{transform_indices = @transform_0, window_bounds = array<i64: 16, 128>}, {transform_indices = @transform_1, window_bounds = array<i64: 16, 128>}, {transform_indices = @transform_2, window_bounds = array<i64: 1, 3, 8, 128>}]} {
    %c0_i32 = arith.constant 0 : i32
    %0 = arith.cmpi eq, %arg1, %c0_i32 : i32
    %1 = arith.extui %0 : i1 to i32
    %c0_i32_0 = arith.constant 0 : i32
    %2 = arith.cmpi ne, %1, %c0_i32_0 : i32
    scf.if %2 {
      %cst_31 = arith.constant 0.000000e+00 : f32
      %39 = vector.broadcast %cst_31 : f32 to vector<1x3x8x128xf32>
      %c0_32 = arith.constant 0 : index
      %c0_33 = arith.constant 0 : index
      %c0_34 = arith.constant 0 : index
      %c0_35 = arith.constant 0 : index
      %40 = vector.load %arg4[%c0_32, %c0_33, %c0_34, %c0_35] : memref<1x3x8x128xf32, #tpu.memory_space<vmem>>, vector<1x3x8x128xf32>
      tpu.vector_store %arg4[%c0_32, %c0_33, %c0_34, %c0_35], %39 {strides = array<i32>} : memref<1x3x8x128xf32, #tpu.memory_space<vmem>>, vector<1x3x8x128xf32>,
    } else {
    }
    %c0 = arith.constant 0 : index
    %c0_1 = arith.constant 0 : index
    %3 = vector.load %arg2[%c0, %c0_1] : memref<16x128xf32, #tpu.memory_space<vmem>>, vector<16x128xf32>
    %c0_2 = arith.constant 0 : index
    %c0_3 = arith.constant 0 : index
    %4 = vector.load %arg3[%c0_2, %c0_3] : memref<16x128xf32, #tpu.memory_space<vmem>>, vector<16x128xf32>
    %cst = arith.constant 9.99999974E-6 : f32
    %5 = vector.broadcast %cst : f32 to vector<16x128xf32>
    %6 = arith.addf %3, %5 : vector<16x128xf32>
    %7 = math.log %6 : vector<16x128xf32>
    %cst_4 = arith.constant 1.000010e+00 : f32
    %8 = vector.broadcast %cst_4 : f32 to vector<16x128xf32>
    %9 = arith.subf %8, %3 : vector<16x128xf32>
    %10 = math.log %9 : vector<16x128xf32>
    %cst_5 = arith.constant 1.000000e+00 : f32
    %11 = vector.broadcast %cst_5 : f32 to vector<16x128xf32>
    %12 = arith.subf %11, %4 : vector<16x128xf32>
    %13 = arith.mulf %12, %10 : vector<16x128xf32>
    %c0_6 = arith.constant 0 : index
    %c0_7 = arith.constant 0 : index
    %c0_8 = arith.constant 0 : index
    %c0_9 = arith.constant 0 : index
    %14 = vector.load %arg4[%c0_6, %c0_7, %c0_8, %c0_9] : memref<1x3x8x128xf32, #tpu.memory_space<vmem>>, vector<1x1x8x128xf32>
    %15 = vector.shape_cast %14 : vector<1x1x8x128xf32> to vector<8x128xf32>
    %16 = vector.shape_cast %3 : vector<16x128xf32> to vector<2x8x128xf32>
    %cst_10 = arith.constant dense<0.000000e+00> : vector<8x128xf32>
    %17 = vector.multi_reduction <add>, %16, %cst_10 [0] : vector<2x8x128xf32> to vector<8x128xf32>
    %18 = arith.addf %15, %17 : vector<8x128xf32>
    %c0_11 = arith.constant 0 : index
    %c0_12 = arith.constant 0 : index
    %c0_13 = arith.constant 0 : index
    %c0_14 = arith.constant 0 : index
    %19 = vector.load %arg4[%c0_11, %c0_12, %c0_13, %c0_14] : memref<1x3x8x128xf32, #tpu.memory_space<vmem>>, vector<1x1x8x128xf32>
    %20 = vector.shape_cast %19 : vector<1x1x8x128xf32> to vector<8x128xf32>
    %21 = vector.shape_cast %18 : vector<8x128xf32> to vector<1x1x8x128xf32>
    tpu.vector_store %arg4[%c0_11, %c0_12, %c0_13, %c0_14], %21 {strides = array<i32>} : memref<1x3x8x128xf32, #tpu.memory_space<vmem>>, vector<1x1x8x128xf32>,
    %c0_15 = arith.constant 0 : index
    %c1 = arith.constant 1 : index
    %c0_16 = arith.constant 0 : index
    %c0_17 = arith.constant 0 : index
    %22 = vector.load %arg4[%c0_15, %c1, %c0_16, %c0_17] : memref<1x3x8x128xf32, #tpu.memory_space<vmem>>, vector<1x1x8x128xf32>
    %23 = vector.shape_cast %22 : vector<1x1x8x128xf32> to vector<8x128xf32>
    %24 = arith.mulf %4, %7 : vector<16x128xf32>
    %25 = vector.shape_cast %24 : vector<16x128xf32> to vector<2x8x128xf32>
    %cst_18 = arith.constant dense<0.000000e+00> : vector<8x128xf32>
    %26 = vector.multi_reduction <add>, %25, %cst_18 [0] : vector<2x8x128xf32> to vector<8x128xf32>
    %27 = arith.addf %23, %26 : vector<8x128xf32>
    %c0_19 = arith.constant 0 : index
    %c1_20 = arith.constant 1 : index
    %c0_21 = arith.constant 0 : index
    %c0_22 = arith.constant 0 : index
    %28 = vector.load %arg4[%c0_19, %c1_20, %c0_21, %c0_22] : memref<1x3x8x128xf32, #tpu.memory_space<vmem>>, vector<1x1x8x128xf32>
    %29 = vector.shape_cast %28 : vector<1x1x8x128xf32> to vector<8x128xf32>
    %30 = vector.shape_cast %27 : vector<8x128xf32> to vector<1x1x8x128xf32>
    tpu.vector_store %arg4[%c0_19, %c1_20, %c0_21, %c0_22], %30 {strides = array<i32>} : memref<1x3x8x128xf32, #tpu.memory_space<vmem>>, vector<1x1x8x128xf32>,
    %c0_23 = arith.constant 0 : index
    %c2 = arith.constant 2 : index
    %c0_24 = arith.constant 0 : index
    %c0_25 = arith.constant 0 : index
    %31 = vector.load %arg4[%c0_23, %c2, %c0_24, %c0_25] : memref<1x3x8x128xf32, #tpu.memory_space<vmem>>, vector<1x1x8x128xf32>
    %32 = vector.shape_cast %31 : vector<1x1x8x128xf32> to vector<8x128xf32>
    %33 = vector.shape_cast %13 : vector<16x128xf32> to vector<2x8x128xf32>
    %cst_26 = arith.constant dense<0.000000e+00> : vector<8x128xf32>
    %34 = vector.multi_reduction <add>, %33, %cst_26 [0] : vector<2x8x128xf32> to vector<8x128xf32>
    %35 = arith.addf %32, %34 : vector<8x128xf32>
    %c0_27 = arith.constant 0 : index
    %c2_28 = arith.constant 2 : index
    %c0_29 = arith.constant 0 : index
    %c0_30 = arith.constant 0 : index
    %36 = vector.load %arg4[%c0_27, %c2_28, %c0_29, %c0_30] : memref<1x3x8x128xf32, #tpu.memory_space<vmem>>, vector<1x1x8x128xf32>
    %37 = vector.shape_cast %36 : vector<1x1x8x128xf32> to vector<8x128xf32>
    %38 = vector.shape_cast %35 : vector<8x128xf32> to vector<1x1x8x128xf32>
    tpu.vector_store %arg4[%c0_27, %c2_28, %c0_29, %c0_30], %38 {strides = array<i32>} : memref<1x3x8x128xf32, #tpu.memory_space<vmem>>, vector<1x1x8x128xf32>,
    return
  }
  func.func @transform_0(%arg0: i32, %arg1: i32) -> (i32, i32) {
    %c1_i32 = arith.constant 1 : i32
    %0 = arith.muli %arg0, %c1_i32 : i32
    %1 = arith.addi %0, %arg1 : i32
    %c0_i32 = arith.constant 0 : i32
    %2 = arith.minsi %1, %c0_i32 : i32
    %c0_i32_0 = arith.constant 0 : i32
    %c0_i32_1 = arith.constant 0 : i32
    return %2, %c0_i32_0 : i32, i32
  }
  func.func @transform_1(%arg0: i32, %arg1: i32) -> (i32, i32) {
    %c1_i32 = arith.constant 1 : i32
    %0 = arith.muli %arg0, %c1_i32 : i32
    %1 = arith.addi %0, %arg1 : i32
    %c0_i32 = arith.constant 0 : i32
    %2 = arith.minsi %1, %c0_i32 : i32
    %c0_i32_0 = arith.constant 0 : i32
    %c0_i32_1 = arith.constant 0 : i32
    return %2, %c0_i32_0 : i32, i32
  }
  func.func @transform_2(%arg0: i32, %arg1: i32) -> (i32, i32, i32, i32) {
    %c0_i32 = arith.constant 0 : i32
    %c0_i32_0 = arith.constant 0 : i32
    %c0_i32_1 = arith.constant 0 : i32
    %c0_i32_2 = arith.constant 0 : i32
    return %arg0, %c0_i32, %c0_i32_0, %c0_i32_1 : i32, i32, i32, i32
  }
}

</mosaic_0001>

<llo_original>
// kernel: tpu_custom_call.1
$region0: #{tpu_custom_call.1}
  #allocation0 [shape = 'u32[]', space=smem, size = 0x4, offset = 0x4, fixed_abs, tag = 'smem constant byte address 0x4 - core index']
  #allocation1 [shape = 'u32[144,128]{1,0:T(1,128)}', space=vmem, size = 0x12000, scoped, tag = 'internal scratch']
  %s0 = inlined_call_operand.hbm [shape: f32[16,128], index: 0, kind: input, shape index: {}]
  %s1 = inlined_call_operand.hbm [shape: f32[16,128], index: 1, kind: input, shape index: {}]
  %s2 = inlined_call_operand.hbm [shape: f32[1,3,8,128], index: 2, kind: output, shape index: {}]
  %s3 = sld [smem:[#allocation0]]
  $region30: #{tpu_custom_call.1} parent=0
    _
  %s5 = ssub.s32 1, %s3
  %s6 = scalar_select 0, %s5, %s3
  $region1: #{tpu_custom_call.1} parent=0
    #allocation2 [shape = 'u8[8192]{0}', space=vmem, size = 0x2000, scoped, tag = 'input window, operand 0, single buffered']
    #allocation3 [shape = 's32[1]{0}', space=sflag, size = 0x4, scoped, tag = 'scoped memory for tpu_custom_call.1']
    #allocation4 [shape = 's32[1]{0}', space=sflag, size = 0x4, scoped, tag = 'scoped memory for tpu_custom_call.1']
    #allocation5 [shape = 'u8[8192]{0}', space=vmem, size = 0x2000, scoped, tag = 'input window, operand 1, single buffered']
    #allocation6 [shape = 's32[1]{0}', space=sflag, size = 0x4, scoped, tag = 'scoped memory for tpu_custom_call.1']
    #allocation7 [shape = 'u8[12288]{0}', space=vmem, size = 0x3000, scoped, tag = 'output window, operand 0, single buffered']
    %7 = vsyncpa [#allocation3], 0
    %8 = vsyncpa [#allocation6], 0
    %9 = vsyncpa [#allocation4], 0
    // Predicated region
    $region2: #{tpu_custom_call.1} parent=1 // pred_check
      _
    $region3: #{tpu_custom_call.1} parent=1 // pred_check_branch
      %11 = sbr.rel (0) target = $region5
    $region4: #{tpu_custom_call.1} parent=1 // pred_region
      %s12 = sadd.s32 0, 0
      %p13 = scmp.lt.s32.totalorder %s12, 0
      %s14 = scalar_select %p13, %s12, 0
      %s15 = smul.u32 2, %s14
      %s17 = ssub.s32 256, 256
      %18 = vsyncadd [#allocation3], %s17
      %s19 = smul.addr %s15, 128
      %s20 = scalar_lea.hbm %s0, %s19
      %s21 = sshll.u32 [#allocation2], 4
      %s22 = int_to_ptr.vmem [resolvable:$true] %s21
      %27 = dma.hbm_to_vmem [thread:$0]  %s20, 256, %s22, [#allocation3], 128, 128, 8
    $region5: #{tpu_custom_call.1} parent=1 // pred_fallthru
      _
    // Predicated region
    $region6: #{tpu_custom_call.1} parent=1 // pred_check
      _
    $region7: #{tpu_custom_call.1} parent=1 // pred_check_branch
      %29 = sbr.rel (0) target = $region9
    $region8: #{tpu_custom_call.1} parent=1 // pred_region
      %s30 = sadd.s32 0, 0
      %p31 = scmp.lt.s32.totalorder %s30, 0
      %s32 = scalar_select %p31, %s30, 0
      %s33 = smul.u32 2, %s32
      %s35 = ssub.s32 256, 256
      %36 = vsyncadd [#allocation6], %s35
      %s37 = smul.addr %s33, 128
      %s38 = scalar_lea.hbm %s1, %s37
      %s39 = sshll.u32 [#allocation5], 4
      %s40 = int_to_ptr.vmem [resolvable:$true] %s39
      %45 = dma.hbm_to_vmem [thread:$0]  %s38, 256, %s40, [#allocation6], 128, 128, 8
    $region9: #{tpu_custom_call.1} parent=1 // pred_fallthru
      _
    // Predicated region
    $region10: #{tpu_custom_call.1} parent=1 // pred_check
      _
    $region11: #{tpu_custom_call.1} parent=1 // pred_check_branch
      %47 = sbr.rel (0) target = $region13
    $region12: #{tpu_custom_call.1} parent=1 // pred_region
      %48 = dma.done [#allocation3], 256
    $region13: #{tpu_custom_call.1} parent=1 // pred_fallthru
      _
    // Predicated region
    $region14: #{tpu_custom_call.1} parent=1 // pred_check
      _
    $region15: #{tpu_custom_call.1} parent=1 // pred_check_branch
      %50 = sbr.rel (0) target = $region17
    $region16: #{tpu_custom_call.1} parent=1 // pred_region
      %51 = dma.done [#allocation6], 256
    $region17: #{tpu_custom_call.1} parent=1 // pred_fallthru
      _
    %s52 = sadd.s32 0, 0
    %p53 = scmp.lt.s32.totalorder %s52, 0
    %s54 = scalar_select %p53, %s52, 0
    %s55 = smul.u32 2, %s54
    %s56 = sadd.s32 0, 0
    %p57 = scmp.lt.s32.totalorder %s56, 0
    %s58 = scalar_select %p57, %s56, 0
    %s59 = smul.u32 2, %s58
    %p60 = scmp.eq.s32.totalorder 0, 0
    // Predicated region
    $region18: #{tpu_custom_call.1} parent=1 // pred_check
      %p61 = pneg %p60
    $region19: #{tpu_custom_call.1} parent=1 // pred_check_branch
      %63 = sbr.rel (%p61) target = $region21
    $region20: #{tpu_custom_call.1} parent=1 // pred_region
      %64 = vst [vmem:[#allocation7] sm:$0xff] 0.0
      %65 = vst [vmem:[#allocation7 + $0x8] sm:$0xff] 0.0
      %66 = vst [vmem:[#allocation7 + $0x10] sm:$0xff] 0.0
    $region21: #{tpu_custom_call.1} parent=1 // pred_fallthru
      _
    %v67 = vld [vmem:[#allocation2] sm:$0xff]
    %v68 = vld [vmem:[#allocation2 + $0x8] sm:$0xff]
    %v69 = vld [vmem:[#allocation5] sm:$0xff]
    %v70 = vld [vmem:[#allocation5 + $0x8] sm:$0xff]
    %v71 = vadd.f32 %v67, 1e-05
    %v72 = vadd.f32 %v68, 1e-05
    %v73 = vlog2.pop %v71
    %v74 = vmul.f32 %v73, 0.6931472
    %v75 = vlog2.pop %v72
    %v76 = vmul.f32 %v75, 0.6931472
    %v77 = vsub.f32 1.00001, %v67
    %v78 = vsub.f32 1.00001, %v68
    %v79 = vlog2.pop %v77
    %v80 = vmul.f32 %v79, 0.6931472
    %v81 = vlog2.pop %v78
    %v82 = vmul.f32 %v81, 0.6931472
    %v83 = vsub.f32 1.0, %v69
    %v84 = vsub.f32 1.0, %v70
    %v85 = vmul.f32 %v83, %v80
    %v86 = vmul.f32 %v84, %v82
    %v87 = vld [vmem:[#allocation7] sm:$0xff]
    %v88 = vadd.f32 %v67, %v68
    %v89 = vadd.f32 %v87, %v88
    %90 = vst [vmem:[#allocation7] sm:$0xff] %v89
    %s91 = scalar_lea.vmem [#allocation7], 8
    %v92 = vld [vmem:[%s91] sm:$0xff]
    %v93 = vmul.f32 %v69, %v74
    %v94 = vmul.f32 %v70, %v76
    %v95 = vadd.f32 %v93, %v94
    %v96 = vadd.f32 %v92, %v95
    %97 = vst [vmem:[%s91] sm:$0xff] %v96
    %s98 = scalar_lea.vmem [#allocation7], 16
    %v99 = vld [vmem:[%s98] sm:$0xff]
    %v100 = vadd.f32 %v85, %v86
    %v101 = vadd.f32 %v99, %v100
    %102 = vst [vmem:[%s98] sm:$0xff] %v101
    // Predicated region
    $region22: #{tpu_custom_call.1} parent=1 // pred_check
      _
    $region23: #{tpu_custom_call.1} parent=1 // pred_check_branch
      %104 = sbr.rel (0) target = $region25
    $region24: #{tpu_custom_call.1} parent=1 // pred_region
      %s106 = ssub.s32 384, 384
      %107 = vsyncadd [#allocation4], %s106
      %s108 = sshll.u32 [#allocation7], 4
      %s109 = int_to_ptr.vmem [resolvable:$true] %s108
      %114 = dma.vmem_to_hbm [thread:$0]  %s109, 384, %s2, [#allocation4], 128, 128, 8
    $region25: #{tpu_custom_call.1} parent=1 // pred_fallthru
      _
    // Predicated region
    $region26: #{tpu_custom_call.1} parent=1 // pred_check
      _
    $region27: #{tpu_custom_call.1} parent=1 // pred_check_branch
      %116 = sbr.rel (0) target = $region29
    $region28: #{tpu_custom_call.1} parent=1 // pred_region
      %117 = dma.done [#allocation4], 384
    $region29: #{tpu_custom_call.1} parent=1 // pred_fallthru
      _
    %118 = vsyncpa [#allocation3], 1
    %119 = vsyncpa [#allocation6], 1
    %120 = vsyncpa [#allocation4], 1

</llo_original>
